<compile_context>
chip_gen: v5e
topology: v5e:2x2
jax: 0.10.0
libtpu: 0.0.40
codegen_flags: <defaults>
</compile_context>

<pallas_src>
import functools

import jax
import jax.numpy as jnp
from jax.experimental import pallas as pl
from jax.experimental.pallas import tpu as pltpu


def _round_up(x, m):
    return (x + m - 1) // m * m


# Safe on v5e/v6e (128 MiB physical) and v7x (64 MiB physical).
_VMEM_LIMIT = 48 * 1024 * 1024


# ---------------------------------------------------------------------------
# Small-graph path: whole 2-layer forward fused in a single kernel,
# everything VMEM-resident.
# ---------------------------------------------------------------------------
def _fused_gwnn_kernel(x_ref, wav_ref, winv_ref, w1_ref, w2_ref,
                       f1_ref, f2_ref, o_ref):
    bf16 = jnp.bfloat16
    wav = wav_ref[...]
    winv = winv_ref[...]

    # conv_1: h1 = relu( wav @ (f1 * (winv @ (x @ W1))) )
    tf1 = jnp.dot(x_ref[...], w1_ref[...], preferred_element_type=jnp.float32)
    t1 = jnp.dot(winv, tf1.astype(bf16), preferred_element_type=jnp.float32)
    t1 = t1 * f1_ref[...]
    h1 = jnp.maximum(
        jnp.dot(wav, t1.astype(bf16), preferred_element_type=jnp.float32), 0.0)

    # dropout: eval mode (training=False) -> identity

    # conv_2: out = wav @ (f2 * (winv @ (h1 @ W2)))
    tf2 = jnp.dot(h1, w2_ref[...], preferred_element_type=jnp.float32)
    t2 = jnp.dot(winv, tf2.astype(bf16), preferred_element_type=jnp.float32)
    t2 = t2 * f2_ref[...]
    o_ref[...] = jnp.dot(wav, t2.astype(bf16),
                         preferred_element_type=jnp.float32).astype(o_ref.dtype)


# ---------------------------------------------------------------------------
# Large-graph path, kernel 1: tiny feature transform  tf = x @ W
# (K = C_in is badly shaped for the MXU; done once per layer outside the
#  big tiled loops).
# ---------------------------------------------------------------------------
def _feature_transform_kernel(x_ref, w_ref, o_ref):
    o_ref[...] = jnp.dot(x_ref[...], w_ref[...],
                         preferred_element_type=jnp.float32).astype(o_ref.dtype)


def _feature_transform(x, w, *, tm, out_dtype):
    n_p, c_in = x.shape
    c_out = w.shape[1]
    return pl.pallas_call(
        _feature_transform_kernel,
        out_shape=jax.ShapeDtypeStruct((n_p, c_out), out_dtype),
        grid_spec=pltpu.PrefetchScalarGridSpec(
            num_scalar_prefetch=0,
            grid=(n_p // tm,),
            in_specs=[pl.BlockSpec((tm, c_in), lambda i: (i, 0)),
                      pl.BlockSpec((c_in, c_out), lambda i: (0, 0))],
            out_specs=pl.BlockSpec((tm, c_out), lambda i: (i, 0)),
        ),
        compiler_params=pltpu.CompilerParams(
            dimension_semantics=("parallel",),
            vmem_limit_bytes=_VMEM_LIMIT),
    )(x, w)


# ---------------------------------------------------------------------------
# Large-graph path, kernel 2:  out = epilogue( A @ B )
#   A: (Np, Np) bf16 wavelet matrix, row/K tiled from HBM.
#   B: (Np, Cp) bf16, VMEM-resident (constant block index -> DMA'd once).
#   f32 accumulation in VMEM scratch.  Epilogue (last K step) optionally:
#   row-scale by the wavelet filter, ReLU, and/or a fused (Cp, Cp') weight.
# ---------------------------------------------------------------------------
def _wavelet_matmul_kernel(*refs, tk, scale_rows, apply_relu, fuse_weight):
    it = iter(refs)
    a_ref = next(it)
    b_ref = next(it)
    filt_ref = next(it) if scale_rows else None
    w_ref = next(it) if fuse_weight else None
    o_ref = next(it)
    acc_ref = next(it)

    k = pl.program_id(1)

    @pl.when(k == 0)
    def _init():
        acc_ref[...] = jnp.zeros_like(acc_ref)

    koff = pl.multiple_of(k * tk, tk)
    acc_ref[...] += jnp.dot(a_ref[...], b_ref[pl.ds(koff, tk), :],
                            preferred_element_type=jnp.float32)

    @pl.when(k == pl.num_programs(1) - 1)
    def _finalize():
        out = acc_ref[...]
        if scale_rows:
            out = out * filt_ref[...]              # (tm, Cp) * (tm, 1)
        if apply_relu:
            out = jnp.maximum(out, 0.0)
        if fuse_weight:
            out = jnp.dot(out, w_ref[...], preferred_element_type=jnp.float32)
        o_ref[...] = out.astype(o_ref.dtype)


def _wavelet_matmul(a, b, *, tm, tk, filt=None, apply_relu=False,
                    post_weight=None, out_dtype=jnp.bfloat16):
    n_p = a.shape[0]
    c_p = b.shape[1]
    scale_rows = filt is not None
    fuse_weight = post_weight is not None
    c_out = post_weight.shape[1] if fuse_weight else c_p

    kernel = functools.partial(_wavelet_matmul_kernel, tk=tk,
                               scale_rows=scale_rows, apply_relu=apply_relu,
                               fuse_weight=fuse_weight)

    in_specs = [
        pl.BlockSpec((tm, tk), lambda i, k: (i, k)),      # A tile (streamed)
        pl.BlockSpec((n_p, c_p), lambda i, k: (0, 0)),    # B resident (single DMA)
    ]
    operands = [a, b]
    if scale_rows:
        in_specs.append(pl.BlockSpec((tm, 1), lambda i, k: (i, 0)))
        operands.append(filt)
    if fuse_weight:
        ci, co = post_weight.shape
        in_specs.append(pl.BlockSpec((ci, co), lambda i, k: (0, 0)))
        operands.append(post_weight)

    return pl.pallas_call(
        kernel,
        out_shape=jax.ShapeDtypeStruct((n_p, c_out), out_dtype),
        grid_spec=pltpu.PrefetchScalarGridSpec(
            num_scalar_prefetch=0,
            grid=(n_p // tm, n_p // tk),
            in_specs=in_specs,
            out_specs=pl.BlockSpec((tm, c_out), lambda i, k: (i, 0)),
            scratch_shapes=[pltpu.VMEM((tm, c_p), jnp.float32)],
        ),
        compiler_params=pltpu.CompilerParams(
            dimension_semantics=("parallel", "arbitrary"),
            vmem_limit_bytes=_VMEM_LIMIT),
    )(*operands)


# ---------------------------------------------------------------------------
# GWNN forward.  make_gwnn_forward prepares (pads + bf16-casts) the heavy
# operands ONCE; the returned forward(x) reuses them across calls.
# ---------------------------------------------------------------------------
def make_gwnn_forward(wavelets, wavelets_inv, params):
    n = wavelets.shape[0]
    feat, hid = params["w1"].shape

    if n <= 512:
        n_p = _round_up(n, 128)       # lane-dense, clean (16,128) bf16 tiles
        tm = tk = n_p
        fused = True
    else:
        n_p = _round_up(n, 256)       # bounded padding, decoupled from tile
        tm = tk = 512 if n_p % 512 == 0 else 256
        fused = False
    c_hid_p = _round_up(hid, 128)
    pad_n = n_p - n
    pad_c = c_hid_p - hid

    # Heavy operands prepared once (hoisted out of per-call forward).
    wav_b = jnp.pad(wavelets, ((0, pad_n), (0, pad_n))).astype(jnp.bfloat16)
    winv_b = jnp.pad(wavelets_inv, ((0, pad_n), (0, pad_n))).astype(jnp.bfloat16)
    w1_p = jnp.pad(params["w1"], ((0, 0), (0, pad_c)))
    w2_p = jnp.pad(params["w2"], ((0, pad_c), (0, pad_c)))
    f1_col = jnp.pad(params["filt1"], (0, pad_n)).reshape(n_p, 1)
    f2_col = jnp.pad(params["filt2"], (0, pad_n)).reshape(n_p, 1)

    if fused:
        def forward(x):
            x_p = jnp.pad(x, ((0, pad_n), (0, 0)))
            out = pl.pallas_call(
                _fused_gwnn_kernel,
                out_shape=jax.ShapeDtypeStruct((n_p, c_hid_p), jnp.float32),
                grid_spec=pltpu.PrefetchScalarGridSpec(
                    num_scalar_prefetch=0,
                    grid=(1,),
                    in_specs=[
                        pl.BlockSpec((n_p, feat), lambda i: (0, 0)),
                        pl.BlockSpec((n_p, n_p), lambda i: (0, 0)),
                        pl.BlockSpec((n_p, n_p), lambda i: (0, 0)),
                        pl.BlockSpec((feat, c_hid_p), lambda i: (0, 0)),
                        pl.BlockSpec((c_hid_p, c_hid_p), lambda i: (0, 0)),
                        pl.BlockSpec((n_p, 1), lambda i: (0, 0)),
                        pl.BlockSpec((n_p, 1), lambda i: (0, 0)),
                    ],
                    out_specs=pl.BlockSpec((n_p, c_hid_p), lambda i: (0, 0)),
                ),
                compiler_params=pltpu.CompilerParams(
                    dimension_semantics=("arbitrary",)),
            )(x_p, wav_b, winv_b, w1_p, w2_p, f1_col, f2_col)
            return out[:n, :hid]
        return forward

    def forward(x):
        x_p = jnp.pad(x, ((0, pad_n), (0, 0)))
        # conv_1:  h1 = relu( wav @ (f1 * (winv @ (x @ W1))) )
        tf1 = _feature_transform(x_p, w1_p, tm=tm, out_dtype=jnp.bfloat16)
        t1s = _wavelet_matmul(winv_b, tf1, filt=f1_col, tm=tm, tk=tk)
        # relu + layer-2 feature transform fused in epilogue: tf2 = relu(.) @ W2
        tf2 = _wavelet_matmul(wav_b, t1s, tm=tm, tk=tk, apply_relu=True,
                              post_weight=w2_p)
        # dropout: eval mode (training=False) -> identity
        # conv_2:  out = wav @ (f2 * (winv @ tf2))
        t2s = _wavelet_matmul(winv_b, tf2, filt=f2_col, tm=tm, tk=tk)
        out = _wavelet_matmul(wav_b, t2s, tm=tm, tk=tk, out_dtype=jnp.float32)
        return out[:n, :hid]
    return forward


def gwnn_forward(x, wavelets, wavelets_inv, params):
    return make_gwnn_forward(wavelets, wavelets_inv, params)(x)


# ---------------------------------------------------------------------------
# Parameter init + pure-JAX reference
# ---------------------------------------------------------------------------
def _xavier_uniform(key, fan_in, fan_out, dtype=jnp.float32):
    bound = (6.0 / (fan_in + fan_out)) ** 0.5
    return jax.random.uniform(key, (fan_in, fan_out), dtype,
                              minval=-bound, maxval=bound)


def init_params(key, feature_dims, hidden_dims, node_num):
    k1, k2, k3, k4 = jax.random.split(key, 4)
    return {
        "w1": _xavier_uniform(k1, feature_dims, hidden_dims),
        "w2": _xavier_uniform(k2, hidden_dims, hidden_dims),
        "filt1": jax.random.uniform(k3, (node_num,), jnp.float32, 0.9, 1.1),
        "filt2": jax.random.uniform(k4, (node_num,), jnp.float32, 0.9, 1.1),
    }


def reference_forward(x, wavelets, wavelets_inv, params):
    def layer(f, w, filt):
        tf = f @ w
        return wavelets @ (filt[:, None] * (wavelets_inv @ tf))
    h1 = jnp.maximum(layer(x, params["w1"], params["filt1"]), 0.0)
    return layer(h1, params["w2"], params["filt2"])


def _rel_err(a, b):
    return float(jnp.linalg.norm(a - b) / (jnp.linalg.norm(b) + 1e-12))


if __name__ == "__main__":
    key = jax.random.PRNGKey(0)

    # ---- small graph: exercises the single fused-kernel path ----
    N, FEAT, HID = 16, 8, 32
    kx, kw, kwi, kp, key = jax.random.split(key, 5)
    x = jax.random.normal(kx, (N, FEAT), jnp.float32)
    wavelets = jax.random.normal(kw, (N, N), jnp.float32) * 0.1
    wavelets_inv = jax.random.normal(kwi, (N, N), jnp.float32) * 0.1
    params = init_params(kp, FEAT, HID, N)

    fwd = make_gwnn_forward(wavelets, wavelets_inv, params)   # pad+cast hoisted
    out = jax.block_until_ready(fwd(x))
    ref = reference_forward(x, wavelets, wavelets_inv, params)
    assert out.shape == (N, HID)
    err = _rel_err(out, ref)
    assert err < 2e-2, f"small-graph mismatch: rel_err={err}"

    # ---- larger graph: exercises the tiled / pipelined path ----
    N2, FEAT2, HID2 = 640, 8, 32
    kx, kw, kwi, kp, key = jax.random.split(key, 5)
    x2 = jax.random.normal(kx, (N2, FEAT2), jnp.float32)
    wav2 = jax.random.normal(kw, (N2, N2), jnp.float32) * 0.05
    wav2_inv = jax.random.normal(kwi, (N2, N2), jnp.float32) * 0.05
    params2 = init_params(kp, FEAT2, HID2, N2)

    fwd2 = make_gwnn_forward(wav2, wav2_inv, params2)
    out2 = jax.block_until_ready(fwd2(x2))
    ref2 = reference_forward(x2, wav2, wav2_inv, params2)
    assert out2.shape == (N2, HID2)
    err2 = _rel_err(out2, ref2)
    assert err2 < 2e-2, f"large-graph mismatch: rel_err={err2}"

    print("KERNEL_OK")
</pallas_src>

<mosaic_0001>
module attributes {stable_mosaic.version = 11 : i64} {
  func.func @_fused_gwnn_kernel(%arg0: i32, %arg1: memref<128x8xf32, #tpu.memory_space<vmem>>, %arg2: memref<128x128xbf16, #tpu.memory_space<vmem>>, %arg3: memref<128x128xbf16, #tpu.memory_space<vmem>>, %arg4: memref<8x128xf32, #tpu.memory_space<vmem>>, %arg5: memref<128x128xf32, #tpu.memory_space<vmem>>, %arg6: memref<128x1xf32, #tpu.memory_space<vmem>>, %arg7: memref<128x1xf32, #tpu.memory_space<vmem>>, %arg8: memref<128x128xf32, #tpu.memory_space<vmem>>) attributes {dimension_semantics = [#tpu.dimension_semantics<arbitrary>], iteration_bounds = array<i64: 1>, scalar_prefetch = 0 : i64, scratch_operands = 0 : i64, tpu.core_type = #tpu.core_type<tc>, window_params = [{pipeline_mode = #tpu.pipeline_mode<synchronous>, transform_indices = @transform_0, window_bounds = array<i64: 128, 8>}, {pipeline_mode = #tpu.pipeline_mode<synchronous>, transform_indices = @transform_1, window_bounds = array<i64: 128, 128>}, {pipeline_mode = #tpu.pipeline_mode<synchronous>, transform_indices = @transform_2, window_bounds = array<i64: 128, 128>}, {pipeline_mode = #tpu.pipeline_mode<synchronous>, transform_indices = @transform_3, window_bounds = array<i64: 8, 128>}, {pipeline_mode = #tpu.pipeline_mode<synchronous>, transform_indices = @transform_4, window_bounds = array<i64: 128, 128>}, {pipeline_mode = #tpu.pipeline_mode<synchronous>, transform_indices = @transform_5, window_bounds = array<i64: 128, 1>}, {pipeline_mode = #tpu.pipeline_mode<synchronous>, transform_indices = @transform_6, window_bounds = array<i64: 128, 1>}, {pipeline_mode = #tpu.pipeline_mode<synchronous>, transform_indices = @transform_7, window_bounds = array<i64: 128, 128>}]} {
    %c0 = arith.constant 0 : index
    %c0_0 = arith.constant 0 : index
    %0 = vector.load %arg2[%c0, %c0_0] : memref<128x128xbf16, #tpu.memory_space<vmem>>, vector<128x128xbf16>
    %c0_1 = arith.constant 0 : index
    %c0_2 = arith.constant 0 : index
    %1 = vector.load %arg3[%c0_1, %c0_2] : memref<128x128xbf16, #tpu.memory_space<vmem>>, vector<128x128xbf16>
    %c0_3 = arith.constant 0 : index
    %c0_4 = arith.constant 0 : index
    %2 = vector.load %arg1[%c0_3, %c0_4] : memref<128x8xf32, #tpu.memory_space<vmem>>, vector<128x8xf32>
    %c0_5 = arith.constant 0 : index
    %c0_6 = arith.constant 0 : index
    %3 = vector.load %arg4[%c0_5, %c0_6] : memref<8x128xf32, #tpu.memory_space<vmem>>, vector<8x128xf32>
    %cst = arith.constant dense<0.000000e+00> : vector<128x128xf32>
    %4 = tpu.matmul %2, %3, %cst {dimension_numbers = #tpu.dot_dimension_numbers<[1], [0], [0], [1], [0, 0, 1, 1], [], []>} : vector<128x8xf32>, vector<8x128xf32>, vector<128x128xf32> -> vector<128x128xf32>
    %5 = arith.truncf %4 : vector<128x128xf32> to vector<128x128xbf16>
    %cst_7 = arith.constant dense<0.000000e+00> : vector<128x128xf32>
    %6 = tpu.matmul %1, %5, %cst_7 {dimension_numbers = #tpu.dot_dimension_numbers<[1], [0], [0], [1], [0, 0, 1, 1], [], []>} : vector<128x128xbf16>, vector<128x128xbf16>, vector<128x128xf32> -> vector<128x128xf32>
    %c0_8 = arith.constant 0 : index
    %c0_9 = arith.constant 0 : index
    %7 = vector.load %arg6[%c0_8, %c0_9] : memref<128x1xf32, #tpu.memory_space<vmem>>, vector<128x1xf32>
    %8 = vector.broadcast %7 : vector<128x1xf32> to vector<128x128xf32>
    %9 = arith.mulf %6, %8 : vector<128x128xf32>
    %10 = arith.truncf %9 : vector<128x128xf32> to vector<128x128xbf16>
    %cst_10 = arith.constant dense<0.000000e+00> : vector<128x128xf32>
    %11 = tpu.matmul %0, %10, %cst_10 {dimension_numbers = #tpu.dot_dimension_numbers<[1], [0], [0], [1], [0, 0, 1, 1], [], []>} : vector<128x128xbf16>, vector<128x128xbf16>, vector<128x128xf32> -> vector<128x128xf32>
    %cst_11 = arith.constant 0.000000e+00 : f32
    %12 = vector.broadcast %cst_11 : f32 to vector<128x128xf32>
    %13 = arith.maximumf %11, %12 : vector<128x128xf32>
    %c0_12 = arith.constant 0 : index
    %c0_13 = arith.constant 0 : index
    %14 = vector.load %arg5[%c0_12, %c0_13] : memref<128x128xf32, #tpu.memory_space<vmem>>, vector<128x128xf32>
    %cst_14 = arith.constant dense<0.000000e+00> : vector<128x128xf32>
    %15 = tpu.matmul %13, %14, %cst_14 {dimension_numbers = #tpu.dot_dimension_numbers<[1], [0], [0], [1], [0, 0, 1, 1], [], []>} : vector<128x128xf32>, vector<128x128xf32>, vector<128x128xf32> -> vector<128x128xf32>
    %16 = arith.truncf %15 : vector<128x128xf32> to vector<128x128xbf16>
    %cst_15 = arith.constant dense<0.000000e+00> : vector<128x128xf32>
    %17 = tpu.matmul %1, %16, %cst_15 {dimension_numbers = #tpu.dot_dimension_numbers<[1], [0], [0], [1], [0, 0, 1, 1], [], []>} : vector<128x128xbf16>, vector<128x128xbf16>, vector<128x128xf32> -> vector<128x128xf32>
    %c0_16 = arith.constant 0 : index
    %c0_17 = arith.constant 0 : index
    %18 = vector.load %arg7[%c0_16, %c0_17] : memref<128x1xf32, #tpu.memory_space<vmem>>, vector<128x1xf32>
    %19 = vector.broadcast %18 : vector<128x1xf32> to vector<128x128xf32>
    %20 = arith.mulf %17, %19 : vector<128x128xf32>
    %21 = arith.truncf %20 : vector<128x128xf32> to vector<128x128xbf16>
    %cst_18 = arith.constant dense<0.000000e+00> : vector<128x128xf32>
    %22 = tpu.matmul %0, %21, %cst_18 {dimension_numbers = #tpu.dot_dimension_numbers<[1], [0], [0], [1], [0, 0, 1, 1], [], []>} : vector<128x128xbf16>, vector<128x128xbf16>, vector<128x128xf32> -> vector<128x128xf32>
    %c0_19 = arith.constant 0 : index
    %c0_20 = arith.constant 0 : index
    %23 = vector.load %arg8[%c0_19, %c0_20] : memref<128x128xf32, #tpu.memory_space<vmem>>, vector<128x128xf32>
    tpu.vector_store %arg8[%c0_19, %c0_20], %22 {strides = array<i32>} : memref<128x128xf32, #tpu.memory_space<vmem>>, vector<128x128xf32>,
    return
  }
  func.func @transform_0(%arg0: i32) -> (i32, i32) {
    %c0_i32 = arith.constant 0 : i32
    %c0_i32_0 = arith.constant 0 : i32
    %c0_i32_1 = arith.constant 0 : i32
    return %c0_i32, %c0_i32_0 : i32, i32
  }
  func.func @transform_1(%arg0: i32) -> (i32, i32) {
    %c0_i32 = arith.constant 0 : i32
    %c0_i32_0 = arith.constant 0 : i32
    %c0_i32_1 = arith.constant 0 : i32
    return %c0_i32, %c0_i32_0 : i32, i32
  }
  func.func @transform_2(%arg0: i32) -> (i32, i32) {
    %c0_i32 = arith.constant 0 : i32
    %c0_i32_0 = arith.constant 0 : i32
    %c0_i32_1 = arith.constant 0 : i32
    return %c0_i32, %c0_i32_0 : i32, i32
  }
  func.func @transform_3(%arg0: i32) -> (i32, i32) {
    %c0_i32 = arith.constant 0 : i32
    %c0_i32_0 = arith.constant 0 : i32
    %c0_i32_1 = arith.constant 0 : i32
    return %c0_i32, %c0_i32_0 : i32, i32
  }
  func.func @transform_4(%arg0: i32) -> (i32, i32) {
    %c0_i32 = arith.constant 0 : i32
    %c0_i32_0 = arith.constant 0 : i32
    %c0_i32_1 = arith.constant 0 : i32
    return %c0_i32, %c0_i32_0 : i32, i32
  }
  func.func @transform_5(%arg0: i32) -> (i32, i32) {
    %c0_i32 = arith.constant 0 : i32
    %c0_i32_0 = arith.constant 0 : i32
    %c0_i32_1 = arith.constant 0 : i32
    return %c0_i32, %c0_i32_0 : i32, i32
  }
  func.func @transform_6(%arg0: i32) -> (i32, i32) {
    %c0_i32 = arith.constant 0 : i32
    %c0_i32_0 = arith.constant 0 : i32
    %c0_i32_1 = arith.constant 0 : i32
    return %c0_i32, %c0_i32_0 : i32, i32
  }
  func.func @transform_7(%arg0: i32) -> (i32, i32) {
    %c0_i32 = arith.constant 0 : i32
    %c0_i32_0 = arith.constant 0 : i32
    %c0_i32_1 = arith.constant 0 : i32
    return %c0_i32, %c0_i32_0 : i32, i32
  }
}

</mosaic_0001>

<llo_original>
// kernel: tpu_custom_call.1
$region0: #{tpu_custom_call.1}
  #allocation0 [shape = 'u32[]', space=smem, size = 0x4, offset = 0x4, fixed_abs, tag = 'smem constant byte address 0x4 - core index']
  #allocation1 [shape = 'u32[72,128]{1,0:T(1,128)}', space=vmem, size = 0x9000, scoped, tag = 'internal scratch']
  %s0 = inlined_call_operand.vmem [shape: f32[128,8], index: 0, kind: input, shape index: {}]
  %s1 = inlined_call_operand.vmem [shape: bf16[128,128], index: 1, kind: input, shape index: {}]
  %s2 = inlined_call_operand.vmem [shape: bf16[128,128], index: 2, kind: input, shape index: {}]
  %s3 = inlined_call_operand.vmem [shape: f32[8,128], index: 3, kind: input, shape index: {}]
  %s4 = inlined_call_operand.vmem [shape: f32[128,128], index: 4, kind: input, shape index: {}]
  %s5 = inlined_call_operand.vmem [shape: f32[128,1], index: 5, kind: input, shape index: {}]
  %s6 = inlined_call_operand.vmem [shape: f32[128,1], index: 6, kind: input, shape index: {}]
  %s7 = inlined_call_operand.hbm [shape: f32[128,128], index: 7, kind: output, shape index: {}]
  %s8 = sld [smem:[#allocation0]]
  $region38: #{tpu_custom_call.1} parent=0
    _
  %s10 = ssub.s32 1, %s8
  %s11 = scalar_select 0, %s10, %s8
  $region1: #{tpu_custom_call.1} parent=0
    #allocation2 [shape = 'u8[65536]{0}', space=vmem, size = 0x10000, scoped, tag = 'output window, operand 0, single buffered']
    #allocation3 [shape = 's32[1]{0}', space=sflag, size = 0x4, scoped, tag = 'scoped memory for tpu_custom_call.1']
    %12 = vsyncpa [#allocation3], 0
    // Predicated region
    $region2: #{tpu_custom_call.1} parent=1 // pred_check
      _
    $region3: #{tpu_custom_call.1} parent=1 // pred_check_branch
      %14 = sbr.rel (0) target = $region5
    $region4: #{tpu_custom_call.1} parent=1 // pred_region
      _
    $region5: #{tpu_custom_call.1} parent=1 // pred_fallthru
      _
    // Predicated region
    $region6: #{tpu_custom_call.1} parent=1 // pred_check
      _
    $region7: #{tpu_custom_call.1} parent=1 // pred_check_branch
      %16 = sbr.rel (0) target = $region9
    $region8: #{tpu_custom_call.1} parent=1 // pred_region
      _
    $region9: #{tpu_custom_call.1} parent=1 // pred_fallthru
      _
    // Predicated region
    $region10: #{tpu_custom_call.1} parent=1 // pred_check
      _
    $region11: #{tpu_custom_call.1} parent=1 // pred_check_branch
      %18 = sbr.rel (0) target = $region13
    $region12: #{tpu_custom_call.1} parent=1 // pred_region
      _
    $region13: #{tpu_custom_call.1} parent=1 // pred_fallthru
      _
    // Predicated region
    $region14: #{tpu_custom_call.1} parent=1 // pred_check
      _
    $region15: #{tpu_custom_call.1} parent=1 // pred_check_branch
      %20 = sbr.rel (0) target = $region17
    $region16: #{tpu_custom_call.1} parent=1 // pred_region
      _
    $region17: #{tpu_custom_call.1} parent=1 // pred_fallthru
      _
    // Predicated region
    $region18: #{tpu_custom_call.1} parent=1 // pred_check
      _
    $region19: #{tpu_custom_call.1} parent=1 // pred_check_branch
      %22 = sbr.rel (0) target = $region21
    $region20: #{tpu_custom_call.1} parent=1 // pred_region
      _
    $region21: #{tpu_custom_call.1} parent=1 // pred_fallthru
      _
    // Predicated region
    $region22: #{tpu_custom_call.1} parent=1 // pred_check
      _
    $region23: #{tpu_custom_call.1} parent=1 // pred_check_branch
      %24 = sbr.rel (0) target = $region25
    $region24: #{tpu_custom_call.1} parent=1 // pred_region
      _
    $region25: #{tpu_custom_call.1} parent=1 // pred_fallthru
      _
    // Predicated region
    $region26: #{tpu_custom_call.1} parent=1 // pred_check
      _
    $region27: #{tpu_custom_call.1} parent=1 // pred_check_branch
      %26 = sbr.rel (0) target = $region29
    $region28: #{tpu_custom_call.1} parent=1 // pred_region
      _
    $region29: #{tpu_custom_call.1} parent=1 // pred_fallthru
      _
    %v27 = vld [vmem:[%s1] sm:$0xf]
    %v28 = vld [vmem:[%s1 + $0x4] sm:$0xf]
    %v29 = vld [vmem:[%s1 + $0x8] sm:$0xf]
    %v30 = vld [vmem:[%s1 + $0xc] sm:$0xf]
    %v31 = vld [vmem:[%s1 + $0x10] sm:$0xf]
    %v32 = vld [vmem:[%s1 + $0x14] sm:$0xf]
    %v33 = vld [vmem:[%s1 + $0x18] sm:$0xf]
    %v34 = vld [vmem:[%s1 + $0x1c] sm:$0xf]
    %v35 = vld [vmem:[%s1 + $0x20] sm:$0xf]
    %v36 = vld [vmem:[%s1 + $0x24] sm:$0xf]
    %v37 = vld [vmem:[%s1 + $0x28] sm:$0xf]
    %v38 = vld [vmem:[%s1 + $0x2c] sm:$0xf]
    %v39 = vld [vmem:[%s1 + $0x30] sm:$0xf]
    %v40 = vld [vmem:[%s1 + $0x34] sm:$0xf]
    %v41 = vld [vmem:[%s1 + $0x38] sm:$0xf]
    %v42 = vld [vmem:[%s1 + $0x3c] sm:$0xf]
    %v43 = vld [vmem:[%s2] sm:$0xf]
    %v44 = vld [vmem:[%s2 + $0x4] sm:$0xf]
    %v45 = vld [vmem:[%s2 + $0x8] sm:$0xf]
    %v46 = vld [vmem:[%s2 + $0xc] sm:$0xf]
    %v47 = vld [vmem:[%s2 + $0x10] sm:$0xf]
    %v48 = vld [vmem:[%s2 + $0x14] sm:$0xf]
    %v49 = vld [vmem:[%s2 + $0x18] sm:$0xf]
    %v50 = vld [vmem:[%s2 + $0x1c] sm:$0xf]
    %v51 = vld [vmem:[%s2 + $0x20] sm:$0xf]
    %v52 = vld [vmem:[%s2 + $0x24] sm:$0xf]
    %v53 = vld [vmem:[%s2 + $0x28] sm:$0xf]
    %v54 = vld [vmem:[%s2 + $0x2c] sm:$0xf]
    %v55 = vld [vmem:[%s2 + $0x30] sm:$0xf]
    %v56 = vld [vmem:[%s2 + $0x34] sm:$0xf]
    %v57 = vld [vmem:[%s2 + $0x38] sm:$0xf]
    %v58 = vld [vmem:[%s2 + $0x3c] sm:$0xf]
    %v59 = vld [vmem:[%s0] sm:$0xff]
    %v60 = vld [vmem:[%s0 + $0x8] sm:$0xff]
    %v61 = vld [vmem:[%s0 + $0x10] sm:$0xff]
    %v62 = vld [vmem:[%s0 + $0x18] sm:$0xff]
    %v63 = vld [vmem:[%s0 + $0x20] sm:$0xff]
    %v64 = vld [vmem:[%s0 + $0x28] sm:$0xff]
    %v65 = vld [vmem:[%s0 + $0x30] sm:$0xff]
    %v66 = vld [vmem:[%s0 + $0x38] sm:$0xff]
    %v67 = vld [vmem:[%s0 + $0x40] sm:$0xff]
    %v68 = vld [vmem:[%s0 + $0x48] sm:$0xff]
    %v69 = vld [vmem:[%s0 + $0x50] sm:$0xff]
    %v70 = vld [vmem:[%s0 + $0x58] sm:$0xff]
    %v71 = vld [vmem:[%s0 + $0x60] sm:$0xff]
    %v72 = vld [vmem:[%s0 + $0x68] sm:$0xff]
    %v73 = vld [vmem:[%s0 + $0x70] sm:$0xff]
    %v74 = vld [vmem:[%s0 + $0x78] sm:$0xff]
    %v75 = vld [vmem:[%s3] sm:$0xff]
    %vm76 = vcmask 64512
    %v78 = vsel %vm76, %v59, 0
    %v81 = vsel %vm76, %v60, 0
    %v84 = vsel %vm76, %v61, 0
    %v87 = vsel %vm76, %v62, 0
    %v90 = vsel %vm76, %v63, 0
    %v93 = vsel %vm76, %v64, 0
    %v96 = vsel %vm76, %v65, 0
    %v99 = vsel %vm76, %v66, 0
    %v102 = vsel %vm76, %v67, 0
    %v105 = vsel %vm76, %v68, 0
    %v108 = vsel %vm76, %v69, 0
    %v111 = vsel %vm76, %v70, 0
    %v114 = vsel %vm76, %v71, 0
    %v117 = vsel %vm76, %v72, 0
    %v120 = vsel %vm76, %v73, 0
    %v123 = vsel %vm76, %v74, 0
    %125 = vmatpush.msra.mxu0 0.0
    %126 = vmatpush.msra.mxu0 0.0
    %127 = vmatpush.msra.mxu0 0.0
    %128 = vmatpush.msra.mxu0 0.0
    %129 = vmatpush.msra.mxu0 0.0
    %130 = vmatpush.msra.mxu0 0.0
    %131 = vmatpush.msra.mxu0 0.0
    %132 = vmatpush.msra.mxu0 0.0
    %133 = vmatpush.msra.mxu0 0.0
    %134 = vmatpush.msra.mxu0 0.0
    %135 = vmatpush.msra.mxu0 0.0
    %136 = vmatpush.msra.mxu0 0.0
    %137 = vmatpush.msra.mxu0 0.0
    %138 = vmatpush.msra.mxu0 0.0
    %139 = vmatpush.msra.mxu0 0.0
    %140 = vmatpush.msra.mxu0 %v75
    %141 = vmatmul.f32.gmra.mxu0 %v78
    %v142 = vpop.f32.mrf.mxu0
    %v143 = vadd.f32 0.0, %v142
    %144 = vmatmul.f32.gmra.mxu0 %v81
    %v145 = vpop.f32.mrf.mxu0
    %v146 = vadd.f32 0.0, %v145
    %147 = vmatmul.f32.gmra.mxu0 %v84
    %v148 = vpop.f32.mrf.mxu0
    %v149 = vadd.f32 0.0, %v148
    %150 = vmatmul.f32.gmra.mxu0 %v87
    %v151 = vpop.f32.mrf.mxu0
    %v152 = vadd.f32 0.0, %v151
    %153 = vmatmul.f32.gmra.mxu0 %v90
    %v154 = vpop.f32.mrf.mxu0
    %v155 = vadd.f32 0.0, %v154
    %156 = vmatmul.f32.gmra.mxu0 %v93
    %v157 = vpop.f32.mrf.mxu0
    %v158 = vadd.f32 0.0, %v157
    %159 = vmatmul.f32.gmra.mxu0 %v96
    %v160 = vpop.f32.mrf.mxu0
    %v161 = vadd.f32 0.0, %v160
    %162 = vmatmul.f32.gmra.mxu0 %v99
    %v163 = vpop.f32.mrf.mxu0
    %v164 = vadd.f32 0.0, %v163
    %165 = vmatmul.f32.gmra.mxu0 %v102
    %v166 = vpop.f32.mrf.mxu0
    %v167 = vadd.f32 0.0, %v166
    %168 = vmatmul.f32.gmra.mxu0 %v105
    %v169 = vpop.f32.mrf.mxu0
    %v170 = vadd.f32 0.0, %v169
    %171 = vmatmul.f32.gmra.mxu0 %v108
    %v172 = vpop.f32.mrf.mxu0
    %v173 = vadd.f32 0.0, %v172
    %174 = vmatmul.f32.gmra.mxu0 %v111
    %v175 = vpop.f32.mrf.mxu0
    %v176 = vadd.f32 0.0, %v175
    %177 = vmatmul.f32.gmra.mxu0 %v114
    %v178 = vpop.f32.mrf.mxu0
    %v179 = vadd.f32 0.0, %v178
    %180 = vmatmul.f32.gmra.mxu0 %v117
    %v181 = vpop.f32.mrf.mxu0
    %v182 = vadd.f32 0.0, %v181
    %183 = vmatmul.f32.gmra.mxu0 %v120
    %v184 = vpop.f32.mrf.mxu0
    %v185 = vadd.f32 0.0, %v184
    %186 = vmatmul.f32.gmra.mxu0 %v123
    %v187 = vpop.f32.mrf.mxu0
    %v188 = vadd.f32 0.0, %v187
    %189 = vdwg.mxu0
    %v190 = vpack.c.bf16 %v146, %v143
    %v191 = vpack.c.bf16 %v152, %v149
    %v192 = vpack.c.bf16 %v158, %v155
    %v193 = vpack.c.bf16 %v164, %v161
    %v194 = vpack.c.bf16 %v170, %v167
    %v195 = vpack.c.bf16 %v176, %v173
    %v196 = vpack.c.bf16 %v182, %v179
    %v197 = vpack.c.bf16 %v188, %v185
    %v214 = vunpack.c.l.b16 %v43
    %v215 = vunpack.c.l.b16 %v44
    %v216 = vunpack.c.l.b16 %v45
    %v217 = vunpack.c.l.b16 %v46
    %v218 = vunpack.c.l.b16 %v47
    %v219 = vunpack.c.l.b16 %v48
    %v220 = vunpack.c.l.b16 %v49
    %v221 = vunpack.c.l.b16 %v50
    %v222 = vunpack.c.l.b16 %v51
    %v223 = vunpack.c.l.b16 %v52
    %v224 = vunpack.c.l.b16 %v53
    %v225 = vunpack.c.l.b16 %v54
    %v226 = vunpack.c.l.b16 %v55
    %v227 = vunpack.c.l.b16 %v56
    %v228 = vunpack.c.l.b16 %v57
    %v229 = vunpack.c.l.b16 %v58
    %v230 = vpack.c.b16 %v215, %v214
    %v231 = vpack.c.b16 %v217, %v216
    %v232 = vpack.c.b16 %v219, %v218
    %v233 = vpack.c.b16 %v221, %v220
    %v234 = vpack.c.b16 %v223, %v222
    %v235 = vpack.c.b16 %v225, %v224
    %v236 = vpack.c.b16 %v227, %v226
    %v237 = vpack.c.b16 %v229, %v228
    %246 = vmatpush.bf16.msra.mxu0 %v197
    %247 = vmatpush.bf16.msra.mxu0 %v196
    %248 = vmatpush.bf16.msra.mxu0 %v195
    %249 = vmatpush.bf16.msra.mxu0 %v194
    %250 = vmatpush.bf16.msra.mxu0 %v193
    %251 = vmatpush.bf16.msra.mxu0 %v192
    %252 = vmatpush.bf16.msra.mxu0 %v191
    %253 = vmatpush.bf16.msra.mxu0 %v190
    %254 = vmatmul.bf16.gmra.mxu0 %v230
    %v255 = vpop.f32.mrf.mxu0
    %v256 = vadd.f32 0.0, %v255
    %v257 = vpop.f32.mrf.mxu0
    %v258 = vadd.f32 0.0, %v257
    %259 = vmatmul.bf16.gmra.mxu0 %v231
    %v260 = vpop.f32.mrf.mxu0
    %v261 = vadd.f32 0.0, %v260
    %v262 = vpop.f32.mrf.mxu0
    %v263 = vadd.f32 0.0, %v262
    %264 = vmatmul.bf16.gmra.mxu0 %v232
    %v265 = vpop.f32.mrf.mxu0
    %v266 = vadd.f32 0.0, %v265
    %v267 = vpop.f32.mrf.mxu0
    %v268 = vadd.f32 0.0, %v267
    %269 = vmatmul.bf16.gmra.mxu0 %v233
    %v270 = vpop.f32.mrf.mxu0
    %v271 = vadd.f32 0.0, %v270
    %v272 = vpop.f32.mrf.mxu0
    %v273 = vadd.f32 0.0, %v272
    %274 = vmatmul.bf16.gmra.mxu0 %v234
    %v275 = vpop.f32.mrf.mxu0
    %v276 = vadd.f32 0.0, %v275
    %v277 = vpop.f32.mrf.mxu0
    %v278 = vadd.f32 0.0, %v277
    %279 = vmatmul.bf16.gmra.mxu0 %v235
    %v280 = vpop.f32.mrf.mxu0
    %v281 = vadd.f32 0.0, %v280
    %v282 = vpop.f32.mrf.mxu0
    %v283 = vadd.f32 0.0, %v282
    %284 = vmatmul.bf16.gmra.mxu0 %v236
    %v285 = vpop.f32.mrf.mxu0
    %v286 = vadd.f32 0.0, %v285
    %v287 = vpop.f32.mrf.mxu0
    %v288 = vadd.f32 0.0, %v287
    %289 = vmatmul.bf16.gmra.mxu0 %v237
    %v290 = vpop.f32.mrf.mxu0
    %v291 = vadd.f32 0.0, %v290
    %v292 = vpop.f32.mrf.mxu0
    %v293 = vadd.f32 0.0, %v292
    %294 = vdwg.mxu0
    %v295 = vld [vmem:[%s5] sm:$0xff]
    %v296 = vld [vmem:[%s5 + $0x8] sm:$0xff]
    %v297 = vld [vmem:[%s5 + $0x10] sm:$0xff]
    %v298 = vld [vmem:[%s5 + $0x18] sm:$0xff]
    %v299 = vld [vmem:[%s5 + $0x20] sm:$0xff]
    %v300 = vld [vmem:[%s5 + $0x28] sm:$0xff]
    %v301 = vld [vmem:[%s5 + $0x30] sm:$0xff]
    %v302 = vld [vmem:[%s5 + $0x38] sm:$0xff]
    %v303 = vld [vmem:[%s5 + $0x40] sm:$0xff]
    %v304 = vld [vmem:[%s5 + $0x48] sm:$0xff]
    %v305 = vld [vmem:[%s5 + $0x50] sm:$0xff]
    %v306 = vld [vmem:[%s5 + $0x58] sm:$0xff]
    %v307 = vld [vmem:[%s5 + $0x60] sm:$0xff]
    %v308 = vld [vmem:[%s5 + $0x68] sm:$0xff]
    %v309 = vld [vmem:[%s5 + $0x70] sm:$0xff]
    %v310 = vld [vmem:[%s5 + $0x78] sm:$0xff]
    %312 = vset.pattern.permute.xlu0 0
    %313 = vperm.xlu0 %312, %v295
    %v314 = vpop.permute.xlu0 %313
    %317 = vset.pattern.permute.xlu0 0
    %318 = vperm.xlu0 %317, %v296
    %v319 = vpop.permute.xlu0 %318
    %322 = vset.pattern.permute.xlu0 0
    %323 = vperm.xlu0 %322, %v297
    %v324 = vpop.permute.xlu0 %323
    %327 = vset.pattern.permute.xlu0 0
    %328 = vperm.xlu0 %327, %v298
    %v329 = vpop.permute.xlu0 %328
    %332 = vset.pattern.permute.xlu0 0
    %333 = vperm.xlu0 %332, %v299
    %v334 = vpop.permute.xlu0 %333
    %337 = vset.pattern.permute.xlu0 0
    %338 = vperm.xlu0 %337, %v300
    %v339 = vpop.permute.xlu0 %338
    %342 = vset.pattern.permute.xlu0 0
    %343 = vperm.xlu0 %342, %v301
    %v344 = vpop.permute.xlu0 %343
    %347 = vset.pattern.permute.xlu0 0
    %348 = vperm.xlu0 %347, %v302
    %v349 = vpop.permute.xlu0 %348
    %352 = vset.pattern.permute.xlu0 0
    %353 = vperm.xlu0 %352, %v303
    %v354 = vpop.permute.xlu0 %353
    %357 = vset.pattern.permute.xlu0 0
    %358 = vperm.xlu0 %357, %v304
    %v359 = vpop.permute.xlu0 %358
    %362 = vset.pattern.permute.xlu0 0
    %363 = vperm.xlu0 %362, %v305
    %v364 = vpop.permute.xlu0 %363
    %367 = vset.pattern.permute.xlu0 0
    %368 = vperm.xlu0 %367, %v306
    %v369 = vpop.permute.xlu0 %368
    %372 = vset.pattern.permute.xlu0 0
    %373 = vperm.xlu0 %372, %v307
    %v374 = vpop.permute.xlu0 %373
    %377 = vset.pattern.permute.xlu0 0
    %378 = vperm.xlu0 %377, %v308
    %v379 = vpop.permute.xlu0 %378
    %382 = vset.pattern.permute.xlu0 0
    %383 = vperm.xlu0 %382, %v309
    %v384 = vpop.permute.xlu0 %383
    %387 = vset.pattern.permute.xlu0 0
    %388 = vperm.xlu0 %387, %v310
    %v389 = vpop.permute.xlu0 %388
    %v391 = vmul.f32 %v256, %v314
    %v392 = vmul.f32 %v258, %v319
    %v393 = vmul.f32 %v261, %v324
    %v394 = vmul.f32 %v263, %v329
    %v395 = vmul.f32 %v266, %v334
    %v396 = vmul.f32 %v268, %v339
    %v397 = vmul.f32 %v271, %v344
    %v398 = vmul.f32 %v273, %v349
    %v399 = vmul.f32 %v276, %v354
    %v400 = vmul.f32 %v278, %v359
    %v401 = vmul.f32 %v281, %v364
    %v402 = vmul.f32 %v283, %v369
    %v403 = vmul.f32 %v286, %v374
    %v404 = vmul.f32 %v288, %v379
    %v405 = vmul.f32 %v291, %v384
    %v406 = vmul.f32 %v293, %v389
    %v407 = vpack.c.bf16 %v392, %v391
    %v408 = vpack.c.bf16 %v394, %v393
    %v409 = vpack.c.bf16 %v396, %v395
    %v410 = vpack.c.bf16 %v398, %v397
    %v411 = vpack.c.bf16 %v400, %v399
    %v412 = vpack.c.bf16 %v402, %v401
    %v413 = vpack.c.bf16 %v404, %v403
    %v414 = vpack.c.bf16 %v406, %v405
    %v431 = vunpack.c.l.b16 %v27
    %v432 = vunpack.c.l.b16 %v28
    %v433 = vunpack.c.l.b16 %v29
    %v434 = vunpack.c.l.b16 %v30
    %v435 = vunpack.c.l.b16 %v31
    %v436 = vunpack.c.l.b16 %v32
    %v437 = vunpack.c.l.b16 %v33
    %v438 = vunpack.c.l.b16 %v34
    %v439 = vunpack.c.l.b16 %v35
    %v440 = vunpack.c.l.b16 %v36
    %v441 = vunpack.c.l.b16 %v37
    %v442 = vunpack.c.l.b16 %v38
    %v443 = vunpack.c.l.b16 %v39
    %v444 = vunpack.c.l.b16 %v40
    %v445 = vunpack.c.l.b16 %v41
    %v446 = vunpack.c.l.b16 %v42
    %v447 = vpack.c.b16 %v432, %v431
    %v448 = vpack.c.b16 %v434, %v433
    %v449 = vpack.c.b16 %v436, %v435
    %v450 = vpack.c.b16 %v438, %v437
    %v451 = vpack.c.b16 %v440, %v439
    %v452 = vpack.c.b16 %v442, %v441
    %v453 = vpack.c.b16 %v444, %v443
    %v454 = vpack.c.b16 %v446, %v445
    %463 = vmatpush.bf16.msra.mxu0 %v414
    %464 = vmatpush.bf16.msra.mxu0 %v413
    %465 = vmatpush.bf16.msra.mxu0 %v412
    %466 = vmatpush.bf16.msra.mxu0 %v411
    %467 = vmatpush.bf16.msra.mxu0 %v410
    %468 = vmatpush.bf16.msra.mxu0 %v409
    %469 = vmatpush.bf16.msra.mxu0 %v408
    %470 = vmatpush.bf16.msra.mxu0 %v407
    %471 = vmatmul.bf16.gmra.mxu0 %v447
    %v472 = vpop.f32.mrf.mxu0
    %v473 = vadd.f32 0.0, %v472
    %v474 = vpop.f32.mrf.mxu0
    %v475 = vadd.f32 0.0, %v474
    %476 = vmatmul.bf16.gmra.mxu0 %v448
    %v477 = vpop.f32.mrf.mxu0
    %v478 = vadd.f32 0.0, %v477
    %v479 = vpop.f32.mrf.mxu0
    %v480 = vadd.f32 0.0, %v479
    %481 = vmatmul.bf16.gmra.mxu0 %v449
    %v482 = vpop.f32.mrf.mxu0
    %v483 = vadd.f32 0.0, %v482
    %v484 = vpop.f32.mrf.mxu0
    %v485 = vadd.f32 0.0, %v484
    %486 = vmatmul.bf16.gmra.mxu0 %v450
    %v487 = vpop.f32.mrf.mxu0
    %v488 = vadd.f32 0.0, %v487
    %v489 = vpop.f32.mrf.mxu0
    %v490 = vadd.f32 0.0, %v489
    %491 = vmatmul.bf16.gmra.mxu0 %v451
    %v492 = vpop.f32.mrf.mxu0
    %v493 = vadd.f32 0.0, %v492
    %v494 = vpop.f32.mrf.mxu0
    %v495 = vadd.f32 0.0, %v494
    %496 = vmatmul.bf16.gmra.mxu0 %v452
    %v497 = vpop.f32.mrf.mxu0
    %v498 = vadd.f32 0.0, %v497
    %v499 = vpop.f32.mrf.mxu0
    %v500 = vadd.f32 0.0, %v499
    %501 = vmatmul.bf16.gmra.mxu0 %v453
    %v502 = vpop.f32.mrf.mxu0
    %v503 = vadd.f32 0.0, %v502
    %v504 = vpop.f32.mrf.mxu0
    %v505 = vadd.f32 0.0, %v504
    %506 = vmatmul.bf16.gmra.mxu0 %v454
    %v507 = vpop.f32.mrf.mxu0
    %v508 = vadd.f32 0.0, %v507
    %v509 = vpop.f32.mrf.mxu0
    %v510 = vadd.f32 0.0, %v509
    %511 = vdwg.mxu0
    %v512 = vmax.f32 %v473, 0.0
    %v513 = vmax.f32 %v475, 0.0
    %v514 = vmax.f32 %v478, 0.0
    %v515 = vmax.f32 %v480, 0.0
    %v516 = vmax.f32 %v483, 0.0
    %v517 = vmax.f32 %v485, 0.0
    %v518 = vmax.f32 %v488, 0.0
    %v519 = vmax.f32 %v490, 0.0
    %v520 = vmax.f32 %v493, 0.0
    %v521 = vmax.f32 %v495, 0.0
    %v522 = vmax.f32 %v498, 0.0
    %v523 = vmax.f32 %v500, 0.0
    %v524 = vmax.f32 %v503, 0.0
    %v525 = vmax.f32 %v505, 0.0
    %v526 = vmax.f32 %v508, 0.0
    %v527 = vmax.f32 %v510, 0.0
    %v528 = vld [vmem:[%s4] sm:$0xff]
    %v529 = vld [vmem:[%s4 + $0x8] sm:$0xff]
    %v530 = vld [vmem:[%s4 + $0x10] sm:$0xff]
    %v531 = vld [vmem:[%s4 + $0x18] sm:$0xff]
    %v532 = vld [vmem:[%s4 + $0x20] sm:$0xff]
    %v533 = vld [vmem:[%s4 + $0x28] sm:$0xff]
    %v534 = vld [vmem:[%s4 + $0x30] sm:$0xff]
    %v535 = vld [vmem:[%s4 + $0x38] sm:$0xff]
    %v536 = vld [vmem:[%s4 + $0x40] sm:$0xff]
    %v537 = vld [vmem:[%s4 + $0x48] sm:$0xff]
    %v538 = vld [vmem:[%s4 + $0x50] sm:$0xff]
    %v539 = vld [vmem:[%s4 + $0x58] sm:$0xff]
    %v540 = vld [vmem:[%s4 + $0x60] sm:$0xff]
    %v541 = vld [vmem:[%s4 + $0x68] sm:$0xff]
    %v542 = vld [vmem:[%s4 + $0x70] sm:$0xff]
    %v543 = vld [vmem:[%s4 + $0x78] sm:$0xff]
    %544 = vmatpush.msra.mxu0 %v543
    %545 = vmatpush.msra.mxu0 %v542
    %546 = vmatpush.msra.mxu0 %v541
    %547 = vmatpush.msra.mxu0 %v540
    %548 = vmatpush.msra.mxu0 %v539
    %549 = vmatpush.msra.mxu0 %v538
    %550 = vmatpush.msra.mxu0 %v537
    %551 = vmatpush.msra.mxu0 %v536
    %552 = vmatpush.msra.mxu0 %v535
    %553 = vmatpush.msra.mxu0 %v534
    %554 = vmatpush.msra.mxu0 %v533
    %555 = vmatpush.msra.mxu0 %v532
    %556 = vmatpush.msra.mxu0 %v531
    %557 = vmatpush.msra.mxu0 %v530
    %558 = vmatpush.msra.mxu0 %v529
    %559 = vmatpush.msra.mxu0 %v528
    %560 = vmatmul.f32.gmra.mxu0 %v512
    %v561 = vpop.f32.mrf.mxu0
    %v562 = vadd.f32 0.0, %v561
    %563 = vmatmul.f32.gmra.mxu0 %v513
    %v564 = vpop.f32.mrf.mxu0
    %v565 = vadd.f32 0.0, %v564
    %566 = vmatmul.f32.gmra.mxu0 %v514
    %v567 = vpop.f32.mrf.mxu0
    %v568 = vadd.f32 0.0, %v567
    %569 = vmatmul.f32.gmra.mxu0 %v515
    %v570 = vpop.f32.mrf.mxu0
    %v571 = vadd.f32 0.0, %v570
    %572 = vmatmul.f32.gmra.mxu0 %v516
    %v573 = vpop.f32.mrf.mxu0
    %v574 = vadd.f32 0.0, %v573
    %575 = vmatmul.f32.gmra.mxu0 %v517
    %v576 = vpop.f32.mrf.mxu0
    %v577 = vadd.f32 0.0, %v576
    %578 = vmatmul.f32.gmra.mxu0 %v518
    %v579 = vpop.f32.mrf.mxu0
    %v580 = vadd.f32 0.0, %v579
    %581 = vmatmul.f32.gmra.mxu0 %v519
    %v582 = vpop.f32.mrf.mxu0
    %v583 = vadd.f32 0.0, %v582
    %584 = vmatmul.f32.gmra.mxu0 %v520
    %v585 = vpop.f32.mrf.mxu0
    %v586 = vadd.f32 0.0, %v585
    %587 = vmatmul.f32.gmra.mxu0 %v521
    %v588 = vpop.f32.mrf.mxu0
    %v589 = vadd.f32 0.0, %v588
    %590 = vmatmul.f32.gmra.mxu0 %v522
    %v591 = vpop.f32.mrf.mxu0
    %v592 = vadd.f32 0.0, %v591
    %593 = vmatmul.f32.gmra.mxu0 %v523
    %v594 = vpop.f32.mrf.mxu0
    %v595 = vadd.f32 0.0, %v594
    %596 = vmatmul.f32.gmra.mxu0 %v524
    %v597 = vpop.f32.mrf.mxu0
    %v598 = vadd.f32 0.0, %v597
    %599 = vmatmul.f32.gmra.mxu0 %v525
    %v600 = vpop.f32.mrf.mxu0
    %v601 = vadd.f32 0.0, %v600
    %602 = vmatmul.f32.gmra.mxu0 %v526
    %v603 = vpop.f32.mrf.mxu0
    %v604 = vadd.f32 0.0, %v603
    %605 = vmatmul.f32.gmra.mxu0 %v527
    %v606 = vpop.f32.mrf.mxu0
    %v607 = vadd.f32 0.0, %v606
    %608 = vdwg.mxu0
    %v609 = vpack.c.bf16 %v565, %v562
    %v610 = vpack.c.bf16 %v571, %v568
    %v611 = vpack.c.bf16 %v577, %v574
    %v612 = vpack.c.bf16 %v583, %v580
    %v613 = vpack.c.bf16 %v589, %v586
    %v614 = vpack.c.bf16 %v595, %v592
    %v615 = vpack.c.bf16 %v601, %v598
    %v616 = vpack.c.bf16 %v607, %v604
    %617 = vmatpush.bf16.msra.mxu0 %v616
    %618 = vmatpush.bf16.msra.mxu0 %v615
    %619 = vmatpush.bf16.msra.mxu0 %v614
    %620 = vmatpush.bf16.msra.mxu0 %v613
    %621 = vmatpush.bf16.msra.mxu0 %v612
    %622 = vmatpush.bf16.msra.mxu0 %v611
    %623 = vmatpush.bf16.msra.mxu0 %v610
    %624 = vmatpush.bf16.msra.mxu0 %v609
    %625 = vmatmul.bf16.gmra.mxu0 %v230
    %v626 = vpop.f32.mrf.mxu0
    %v627 = vadd.f32 0.0, %v626
    %v628 = vpop.f32.mrf.mxu0
    %v629 = vadd.f32 0.0, %v628
    %630 = vmatmul.bf16.gmra.mxu0 %v231
    %v631 = vpop.f32.mrf.mxu0
    %v632 = vadd.f32 0.0, %v631
    %v633 = vpop.f32.mrf.mxu0
    %v634 = vadd.f32 0.0, %v633
    %635 = vmatmul.bf16.gmra.mxu0 %v232
    %v636 = vpop.f32.mrf.mxu0
    %v637 = vadd.f32 0.0, %v636
    %v638 = vpop.f32.mrf.mxu0
    %v639 = vadd.f32 0.0, %v638
    %640 = vmatmul.bf16.gmra.mxu0 %v233
    %v641 = vpop.f32.mrf.mxu0
    %v642 = vadd.f32 0.0, %v641
    %v643 = vpop.f32.mrf.mxu0
    %v644 = vadd.f32 0.0, %v643
    %645 = vmatmul.bf16.gmra.mxu0 %v234
    %v646 = vpop.f32.mrf.mxu0
    %v647 = vadd.f32 0.0, %v646
    %v648 = vpop.f32.mrf.mxu0
    %v649 = vadd.f32 0.0, %v648
    %650 = vmatmul.bf16.gmra.mxu0 %v235
    %v651 = vpop.f32.mrf.mxu0
    %v652 = vadd.f32 0.0, %v651
    %v653 = vpop.f32.mrf.mxu0
    %v654 = vadd.f32 0.0, %v653
    %655 = vmatmul.bf16.gmra.mxu0 %v236
    %v656 = vpop.f32.mrf.mxu0
    %v657 = vadd.f32 0.0, %v656
    %v658 = vpop.f32.mrf.mxu0
    %v659 = vadd.f32 0.0, %v658
    %660 = vmatmul.bf16.gmra.mxu0 %v237
    %v661 = vpop.f32.mrf.mxu0
    %v662 = vadd.f32 0.0, %v661
    %v663 = vpop.f32.mrf.mxu0
    %v664 = vadd.f32 0.0, %v663
    %665 = vdwg.mxu0
    %v666 = vld [vmem:[%s6] sm:$0xff]
    %v667 = vld [vmem:[%s6 + $0x8] sm:$0xff]
    %v668 = vld [vmem:[%s6 + $0x10] sm:$0xff]
    %v669 = vld [vmem:[%s6 + $0x18] sm:$0xff]
    %v670 = vld [vmem:[%s6 + $0x20] sm:$0xff]
    %v671 = vld [vmem:[%s6 + $0x28] sm:$0xff]
    %v672 = vld [vmem:[%s6 + $0x30] sm:$0xff]
    %v673 = vld [vmem:[%s6 + $0x38] sm:$0xff]
    %v674 = vld [vmem:[%s6 + $0x40] sm:$0xff]
    %v675 = vld [vmem:[%s6 + $0x48] sm:$0xff]
    %v676 = vld [vmem:[%s6 + $0x50] sm:$0xff]
    %v677 = vld [vmem:[%s6 + $0x58] sm:$0xff]
    %v678 = vld [vmem:[%s6 + $0x60] sm:$0xff]
    %v679 = vld [vmem:[%s6 + $0x68] sm:$0xff]
    %v680 = vld [vmem:[%s6 + $0x70] sm:$0xff]
    %v681 = vld [vmem:[%s6 + $0x78] sm:$0xff]
    %683 = vset.pattern.permute.xlu0 0
    %684 = vperm.xlu0 %683, %v666
    %v685 = vpop.permute.xlu0 %684
    %688 = vset.pattern.permute.xlu0 0
    %689 = vperm.xlu0 %688, %v667
    %v690 = vpop.permute.xlu0 %689
    %693 = vset.pattern.permute.xlu0 0
    %694 = vperm.xlu0 %693, %v668
    %v695 = vpop.permute.xlu0 %694
    %698 = vset.pattern.permute.xlu0 0
    %699 = vperm.xlu0 %698, %v669
    %v700 = vpop.permute.xlu0 %699
    %703 = vset.pattern.permute.xlu0 0
    %704 = vperm.xlu0 %703, %v670
    %v705 = vpop.permute.xlu0 %704
    %708 = vset.pattern.permute.xlu0 0
    %709 = vperm.xlu0 %708, %v671
    %v710 = vpop.permute.xlu0 %709
    %713 = vset.pattern.permute.xlu0 0
    %714 = vperm.xlu0 %713, %v672
    %v715 = vpop.permute.xlu0 %714
    %718 = vset.pattern.permute.xlu0 0
    %719 = vperm.xlu0 %718, %v673
    %v720 = vpop.permute.xlu0 %719
    %723 = vset.pattern.permute.xlu0 0
    %724 = vperm.xlu0 %723, %v674
    %v725 = vpop.permute.xlu0 %724
    %728 = vset.pattern.permute.xlu0 0
    %729 = vperm.xlu0 %728, %v675
    %v730 = vpop.permute.xlu0 %729
    %733 = vset.pattern.permute.xlu0 0
    %734 = vperm.xlu0 %733, %v676
    %v735 = vpop.permute.xlu0 %734
    %738 = vset.pattern.permute.xlu0 0
    %739 = vperm.xlu0 %738, %v677
    %v740 = vpop.permute.xlu0 %739
    %743 = vset.pattern.permute.xlu0 0
    %744 = vperm.xlu0 %743, %v678
    %v745 = vpop.permute.xlu0 %744
    %748 = vset.pattern.permute.xlu0 0
    %749 = vperm.xlu0 %748, %v679
    %v750 = vpop.permute.xlu0 %749
    %753 = vset.pattern.permute.xlu0 0
    %754 = vperm.xlu0 %753, %v680
    %v755 = vpop.permute.xlu0 %754
    %758 = vset.pattern.permute.xlu0 0
    %759 = vperm.xlu0 %758, %v681
    %v760 = vpop.permute.xlu0 %759
    %v762 = vmul.f32 %v627, %v685
    %v763 = vmul.f32 %v629, %v690
    %v764 = vmul.f32 %v632, %v695
    %v765 = vmul.f32 %v634, %v700
    %v766 = vmul.f32 %v637, %v705
    %v767 = vmul.f32 %v639, %v710
    %v768 = vmul.f32 %v642, %v715
    %v769 = vmul.f32 %v644, %v720
    %v770 = vmul.f32 %v647, %v725
    %v771 = vmul.f32 %v649, %v730
    %v772 = vmul.f32 %v652, %v735
    %v773 = vmul.f32 %v654, %v740
    %v774 = vmul.f32 %v657, %v745
    %v775 = vmul.f32 %v659, %v750
    %v776 = vmul.f32 %v662, %v755
    %v777 = vmul.f32 %v664, %v760
    %v778 = vpack.c.bf16 %v763, %v762
    %v779 = vpack.c.bf16 %v765, %v764
    %v780 = vpack.c.bf16 %v767, %v766
    %v781 = vpack.c.bf16 %v769, %v768
    %v782 = vpack.c.bf16 %v771, %v770
    %v783 = vpack.c.bf16 %v773, %v772
    %v784 = vpack.c.bf16 %v775, %v774
    %v785 = vpack.c.bf16 %v777, %v776
    %786 = vmatpush.bf16.msra.mxu0 %v785
    %787 = vmatpush.bf16.msra.mxu0 %v784
    %788 = vmatpush.bf16.msra.mxu0 %v783
    %789 = vmatpush.bf16.msra.mxu0 %v782
    %790 = vmatpush.bf16.msra.mxu0 %v781
    %791 = vmatpush.bf16.msra.mxu0 %v780
    %792 = vmatpush.bf16.msra.mxu0 %v779
    %793 = vmatpush.bf16.msra.mxu0 %v778
    %794 = vmatmul.bf16.gmra.mxu0 %v447
    %v795 = vpop.f32.mrf.mxu0
    %v796 = vadd.f32 0.0, %v795
    %v797 = vpop.f32.mrf.mxu0
    %v798 = vadd.f32 0.0, %v797
    %799 = vmatmul.bf16.gmra.mxu0 %v448
    %v800 = vpop.f32.mrf.mxu0
    %v801 = vadd.f32 0.0, %v800
    %v802 = vpop.f32.mrf.mxu0
    %v803 = vadd.f32 0.0, %v802
    %804 = vmatmul.bf16.gmra.mxu0 %v449
    %v805 = vpop.f32.mrf.mxu0
    %v806 = vadd.f32 0.0, %v805
    %v807 = vpop.f32.mrf.mxu0
    %v808 = vadd.f32 0.0, %v807
    %809 = vmatmul.bf16.gmra.mxu0 %v450
    %v810 = vpop.f32.mrf.mxu0
    %v811 = vadd.f32 0.0, %v810
    %v812 = vpop.f32.mrf.mxu0
    %v813 = vadd.f32 0.0, %v812
    %814 = vmatmul.bf16.gmra.mxu0 %v451
    %v815 = vpop.f32.mrf.mxu0
    %v816 = vadd.f32 0.0, %v815
    %v817 = vpop.f32.mrf.mxu0
    %v818 = vadd.f32 0.0, %v817
    %819 = vmatmul.bf16.gmra.mxu0 %v452
    %v820 = vpop.f32.mrf.mxu0
    %v821 = vadd.f32 0.0, %v820
    %v822 = vpop.f32.mrf.mxu0
    %v823 = vadd.f32 0.0, %v822
    %824 = vmatmul.bf16.gmra.mxu0 %v453
    %v825 = vpop.f32.mrf.mxu0
    %v826 = vadd.f32 0.0, %v825
    %v827 = vpop.f32.mrf.mxu0
    %v828 = vadd.f32 0.0, %v827
    %829 = vmatmul.bf16.gmra.mxu0 %v454
    %v830 = vpop.f32.mrf.mxu0
    %v831 = vadd.f32 0.0, %v830
    %v832 = vpop.f32.mrf.mxu0
    %v833 = vadd.f32 0.0, %v832
    %834 = vdwg.mxu0
    %835 = vst [vmem:[#allocation2] sm:$0xff] %v796
    %836 = vst [vmem:[#allocation2 + $0x8] sm:$0xff] %v798
    %837 = vst [vmem:[#allocation2 + $0x10] sm:$0xff] %v801
    %838 = vst [vmem:[#allocation2 + $0x18] sm:$0xff] %v803
    %839 = vst [vmem:[#allocation2 + $0x20] sm:$0xff] %v806
    %840 = vst [vmem:[#allocation2 + $0x28] sm:$0xff] %v808
    %841 = vst [vmem:[#allocation2 + $0x30] sm:$0xff] %v811
    %842 = vst [vmem:[#allocation2 + $0x38] sm:$0xff] %v813
    %843 = vst [vmem:[#allocation2 + $0x40] sm:$0xff] %v816
    %844 = vst [vmem:[#allocation2 + $0x48] sm:$0xff] %v818
    %845 = vst [vmem:[#allocation2 + $0x50] sm:$0xff] %v821
    %846 = vst [vmem:[#allocation2 + $0x58] sm:$0xff] %v823
    %847 = vst [vmem:[#allocation2 + $0x60] sm:$0xff] %v826
    %848 = vst [vmem:[#allocation2 + $0x68] sm:$0xff] %v828
    %849 = vst [vmem:[#allocation2 + $0x70] sm:$0xff] %v831
    %850 = vst [vmem:[#allocation2 + $0x78] sm:$0xff] %v833
    // Predicated region
    $region30: #{tpu_custom_call.1} parent=1 // pred_check
      _
    $region31: #{tpu_custom_call.1} parent=1 // pred_check_branch
      %852 = sbr.rel (0) target = $region33
    $region32: #{tpu_custom_call.1} parent=1 // pred_region
      %854 = vsyncadd [#allocation3], 0
      %s855 = sshll.u32 [#allocation2], 4
      %s856 = int_to_ptr.vmem [resolvable:$true] %s855
      %s857 = sshll.u32 %s7, 4
      %s858 = int_to_ptr.hbm [resolvable:$true] %s857
      %863 = dma.vmem_to_hbm [thread:$0]  %s856, 2048, %s858, [#allocation3], 128, 128, 8
    $region33: #{tpu_custom_call.1} parent=1 // pred_fallthru
      _
    // Predicated region
    $region34: #{tpu_custom_call.1} parent=1 // pred_check
      _
    $region35: #{tpu_custom_call.1} parent=1 // pred_check_branch
      %865 = sbr.rel (0) target = $region37
    $region36: #{tpu_custom_call.1} parent=1 // pred_region
      %867 = dma.done [#allocation3], 2048
    $region37: #{tpu_custom_call.1} parent=1 // pred_fallthru
      _
    %868 = vsyncpa [#allocation3], 1

</llo_original>
